<compile_context>
chip_gen: v7x
topology: tpu7x:2x2x1
jax: 0.10.0
libtpu: 0.0.40
codegen_flags: <defaults>
</compile_context>

<pallas_src>
import functools

import jax
import jax.numpy as jnp
from jax.experimental import pallas as pl
from jax.experimental.pallas import tpu as pltpu

_LANES = 128


def _round_up(x, m):
    return ((x + m - 1) // m) * m


def _sublane_multiple(dtype):
    # 8 for 4-byte dtypes, 16 for 2-byte, 32 for 1-byte.
    return max(8, 32 // jnp.dtype(dtype).itemsize)


def _chip_config():
    """Per-generation sizing, with conservative fallbacks."""
    kind = ""
    try:
        kind = jax.devices()[0].device_kind.lower()
    except Exception:
        pass
    gen = 0
    for g in (7, 6, 5, 4):
        if f"v{g}" in kind:
            gen = g
            break
    num_tc = 2 if gen >= 7 else 1          # v7x: 2 TensorCores per chip
    if gen >= 7:
        target_tile = 8 * 1024 * 1024      # ~2.5 us DMA per tile at 3.2 TB/s/TC
        vmem_limit = 44 * 1024 * 1024      # 4x tile double-buffer + headroom (< 64 MiB)
    else:
        target_tile = 4 * 1024 * 1024      # 85-86% roofline plateau on v5e/v6e
        vmem_limit = 32 * 1024 * 1024
    try:
        # Refine against the real per-core VMEM size, keeping scratch headroom.
        vmem_cap = pltpu.get_tpu_info().vmem_capacity_bytes
        vmem_limit = min(vmem_limit, max(vmem_cap - 16 * 1024 * 1024, vmem_cap // 2))
    except Exception:
        pass
    bf16_native = gen >= 6                 # v6e/v7x have bf16 VPU/EUP; v5e does not
    return num_tc, target_tile, vmem_limit, bf16_native


_NUM_TC, _TARGET_TILE_BYTES, _VMEM_LIMIT_BYTES, _BF16_NATIVE = _chip_config()


def _sclu_kernel(x_ref, o_ref, *, s, c, a, fused, compute_dtype):
    x = x_ref[...].astype(compute_dtype)   # identity cast on bf16-native path
    inv_a = 1.0 / a
    if fused:
        # s == c:  sin(s*x) * cos(s*x) == 0.5 * sin(2*s*x)  -> one EUP push.
        y = jnp.sin(x * (2.0 * s)) * (0.5 * inv_a) + x
    else:
        y = jnp.sin(x * s) * jnp.cos(x * c) * inv_a + x
    o_ref[...] = y.astype(o_ref.dtype)


def _pick_width(n):
    """Widest lane-dense view width dividing n (n is a multiple of 128)."""
    for w in (1024, 512, 256):
        if n % w == 0 and n // w >= 8:
            return w
    return _LANES


def _choose_tile_rows(rows, width, dtype):
    sub = _sublane_multiple(dtype)
    if rows <= sub:
        return rows  # block equals the full (small) array dim
    itemsize = jnp.dtype(dtype).itemsize
    tr = max(sub, (_TARGET_TILE_BYTES // (width * itemsize)) // sub * sub)
    tr = min(tr, rows)
    if tr < rows:
        tr = max(sub, (tr // sub) * sub)
    if _NUM_TC >= 2:
        steps = pl.cdiv(rows, tr)
        if steps < 2 and rows >= 2 * sub:
            steps = 2  # give both v7x TensorCores work
        if 2 <= steps <= 8:
            # Even step count with (nearly) equal blocks so neither TC sits
            # idle on an odd step count or a sliver trailing block.
            even_steps = steps + (steps % 2)
            tr = min(rows, _round_up(pl.cdiv(rows, even_steps), sub))
    return tr


def _sclu_2d(x2d, s, c, a):
    rows, width = x2d.shape
    tr = _choose_tile_rows(rows, width, x2d.dtype)

    compute_dtype = (x2d.dtype
                     if (_BF16_NATIVE and x2d.dtype == jnp.bfloat16)
                     else jnp.float32)
    kernel = functools.partial(
        _sclu_kernel, s=float(s), c=float(c), a=float(a),
        fused=(float(s) == float(c)), compute_dtype=compute_dtype,
    )

    return pl.pallas_call(
        kernel,
        out_shape=jax.ShapeDtypeStruct((rows, width), x2d.dtype),
        grid_spec=pltpu.PrefetchScalarGridSpec(
            num_scalar_prefetch=0,
            grid=(pl.cdiv(rows, tr),),
            in_specs=[pl.BlockSpec((tr, width), lambda i: (i, 0))],
            out_specs=pl.BlockSpec((tr, width), lambda i: (i, 0)),
        ),
        compiler_params=pltpu.CompilerParams(
            dimension_semantics=("parallel",),
            vmem_limit_bytes=_VMEM_LIMIT_BYTES,
        ),
        # NOTE: input_output_aliases={0: 0} would save an HBM allocation but
        # requires donation semantics from the caller, so it is not enabled.
    )(x2d)


def _sclu_jnp(x, s, c, a):
    xf = x.astype(jnp.float32)
    return (jnp.sin(xf * s) * jnp.cos(xf * c) / a + xf).astype(x.dtype)


def sclu(x, s_cycle=1.0, c_cycle=1.0, a_scale=1.0):
    """Applies SCLU elementwise to `x` (any shape, any float dtype).

    s_cycle / c_cycle / a_scale must be static Python scalars (as in the
    reference nn.Module, where they are fixed at __init__).
    """
    orig_shape = x.shape
    flat = x.reshape(-1)
    n = flat.shape[0]
    if n == 0:
        return x

    main_n = (n // _LANES) * _LANES
    if main_n == 0:
        # Tiny (< 128-element) input: not worth a kernel launch.
        return _sclu_jnp(flat, s_cycle, c_cycle, a_scale).reshape(orig_shape)

    width = _pick_width(main_n)
    main_out = _sclu_2d(flat[:main_n].reshape(main_n // width, width),
                        s_cycle, c_cycle, a_scale).reshape(-1)
    if main_n == n:
        return main_out.reshape(orig_shape)

    # Prefix+tail: the bulk ran zero-copy at the HBM roofline; only the
    # sub-128-element tail is handled with plain jnp, then re-joined.
    tail_out = _sclu_jnp(flat[main_n:], s_cycle, c_cycle, a_scale)
    return jnp.concatenate([main_out, tail_out]).reshape(orig_shape)


def sclu_reference(x, s=1.0, c=1.0, a=1.0):
    xf = x.astype(jnp.float32)
    return (jnp.sin(xf * s) * jnp.cos(xf * c) / a + xf).astype(x.dtype)


if __name__ == "__main__":
    key = jax.random.PRNGKey(0)

    # 1) NCHW-like activation, general s != c path (zero-copy fast path).
    x = jax.random.normal(key, (2, 4, 16, 16), dtype=jnp.float32)
    out = jax.block_until_ready(sclu(x, 2.0, 3.0, 1.5))
    ref = sclu_reference(x, 2.0, 3.0, 1.5)
    assert out.shape == x.shape and out.dtype == x.dtype
    assert jnp.allclose(out, ref, atol=1e-5, rtol=1e-5), "mismatch (s != c)"

    # 2) Module defaults (s == c == a == 1) -> fused 0.5*sin(2x) path.
    out = jax.block_until_ready(sclu(x, 1.0, 1.0, 1.0))
    ref = sclu_reference(x, 1.0, 1.0, 1.0)
    assert jnp.allclose(out, ref, atol=1e-5, rtol=1e-5), "mismatch (fused s == c)"

    # 3) Row count not a multiple of the block rows -> masked partial block.
    x3 = jax.random.normal(key, (8, 144), dtype=jnp.float32)  # 1152 = 9 * 128
    out = jax.block_until_ready(sclu(x3, 2.0, 3.0, 1.5))
    assert jnp.allclose(out, sclu_reference(x3, 2.0, 3.0, 1.5),
                        atol=1e-5, rtol=1e-5), "mismatch (partial block)"

    # 4) Total size not a multiple of 128 -> prefix+tail path.
    x4 = jax.random.normal(key, (3, 5, 7, 11), dtype=jnp.float32)  # 1155 elems
    out = jax.block_until_ready(sclu(x4, 2.0, 3.0, 1.5))
    assert jnp.allclose(out, sclu_reference(x4, 2.0, 3.0, 1.5),
                        atol=1e-5, rtol=1e-5), "mismatch (prefix+tail)"

    # 5) bf16 input: native bf16 compute on v6e/v7x, f32 compute on v5e.
    xb = jax.random.normal(key, (2, 4, 16, 16), dtype=jnp.bfloat16)
    out = jax.block_until_ready(sclu(xb, 2.0, 3.0, 1.5))
    refb = sclu_reference(xb, 2.0, 3.0, 1.5)
    assert out.dtype == jnp.bfloat16
    assert jnp.allclose(out.astype(jnp.float32), refb.astype(jnp.float32),
                        atol=5e-2, rtol=5e-2), "mismatch (bf16)"

    print("KERNEL_OK")
</pallas_src>

<mosaic_0001>
module attributes {stable_mosaic.version = 11 : i64} {
  func.func @_sclu_kernel(%arg0: i32, %arg1: memref<8x256xf32, #tpu.memory_space<vmem>>, %arg2: memref<8x256xf32, #tpu.memory_space<vmem>>) attributes {dimension_semantics = [#tpu.dimension_semantics<parallel>], iteration_bounds = array<i64: 1>, scalar_prefetch = 0 : i64, scratch_operands = 0 : i64, tpu.core_type = #tpu.core_type<tc>, window_params = [{transform_indices = @transform_0, window_bounds = array<i64: 8, 256>}, {transform_indices = @transform_1, window_bounds = array<i64: 8, 256>}]} {
    %c0 = arith.constant 0 : index
    %c0_0 = arith.constant 0 : index
    %0 = vector.load %arg1[%c0, %c0_0] : memref<8x256xf32, #tpu.memory_space<vmem>>, vector<8x256xf32>
    %cst = arith.constant 2.000000e+00 : f32
    %1 = vector.broadcast %cst : f32 to vector<8x256xf32>
    %2 = arith.mulf %0, %1 : vector<8x256xf32>
    %3 = math.sin %2 : vector<8x256xf32>
    %cst_1 = arith.constant 3.000000e+00 : f32
    %4 = vector.broadcast %cst_1 : f32 to vector<8x256xf32>
    %5 = arith.mulf %0, %4 : vector<8x256xf32>
    %6 = math.cos %5 : vector<8x256xf32>
    %7 = arith.mulf %3, %6 : vector<8x256xf32>
    %cst_2 = arith.constant 0.666666686 : f32
    %8 = vector.broadcast %cst_2 : f32 to vector<8x256xf32>
    %9 = arith.mulf %7, %8 : vector<8x256xf32>
    %10 = arith.addf %9, %0 : vector<8x256xf32>
    %c0_3 = arith.constant 0 : index
    %c0_4 = arith.constant 0 : index
    %11 = vector.load %arg2[%c0_3, %c0_4] : memref<8x256xf32, #tpu.memory_space<vmem>>, vector<8x256xf32>
    tpu.vector_store %arg2[%c0_3, %c0_4], %10 {strides = array<i32>} : memref<8x256xf32, #tpu.memory_space<vmem>>, vector<8x256xf32>,
    return
  }
  func.func @transform_0(%arg0: i32) -> (i32, i32) {
    %c0_i32 = arith.constant 0 : i32
    %c0_i32_0 = arith.constant 0 : i32
    return %arg0, %c0_i32 : i32, i32
  }
  func.func @transform_1(%arg0: i32) -> (i32, i32) {
    %c0_i32 = arith.constant 0 : i32
    %c0_i32_0 = arith.constant 0 : i32
    return %arg0, %c0_i32 : i32, i32
  }
}

</mosaic_0001>

<llo_original>
// kernel: tpu_custom_call.1
$region0: #{tpu_custom_call.1}
  #allocation0 [shape = 'u32[]', space=smem, size = 0x4, offset = 0x4, fixed_abs, tag = 'smem constant byte address 0x4 - core index']
  #allocation1 [shape = 'u32[144,128]{1,0:T(1,128)}', space=vmem, size = 0x12000, scoped, tag = 'internal scratch']
  %s0 = inlined_call_operand.hbm [shape: f32[8,256], index: 0, kind: input, shape index: {}]
  %s1 = inlined_call_operand.hbm [shape: f32[8,256], index: 1, kind: output, shape index: {}]
  %s2 = sld [smem:[#allocation0]]
  $region18: #{tpu_custom_call.1} parent=0
    _
  %s4 = ssub.s32 1, %s2
  %s5 = scalar_select 0, %s4, %s2
  $region1: #{tpu_custom_call.1} parent=0
    #allocation2 [shape = 'u8[8192]{0}', space=vmem, size = 0x2000, scoped, tag = 'input window, operand 0, single buffered']
    #allocation3 [shape = 's32[1]{0}', space=sflag, size = 0x4, scoped, tag = 'scoped memory for tpu_custom_call.1']
    #allocation4 [shape = 's32[1]{0}', space=sflag, size = 0x4, scoped, tag = 'scoped memory for tpu_custom_call.1']
    #allocation5 [shape = 'u8[8192]{0}', space=vmem, size = 0x2000, scoped, tag = 'output window, operand 0, single buffered']
    %6 = vsyncpa [#allocation3], 0
    %7 = vsyncpa [#allocation4], 0
    // Predicated region
    $region2: #{tpu_custom_call.1} parent=1 // pred_check
      _
    $region3: #{tpu_custom_call.1} parent=1 // pred_check_branch
      %9 = sbr.rel (0) target = $region5
    $region4: #{tpu_custom_call.1} parent=1 // pred_region
      %s11 = ssub.s32 256, 256
      %12 = vsyncadd [#allocation3], %s11
      %s14 = sshll.u32 [#allocation2], 4
      %s15 = int_to_ptr.vmem [resolvable:$true] %s14
      %17 = dma.hbm_to_vmem [thread:$0]  %s0, 256, %s15, [#allocation3]
    $region5: #{tpu_custom_call.1} parent=1 // pred_fallthru
      _
    // Predicated region
    $region6: #{tpu_custom_call.1} parent=1 // pred_check
      _
    $region7: #{tpu_custom_call.1} parent=1 // pred_check_branch
      %19 = sbr.rel (0) target = $region9
    $region8: #{tpu_custom_call.1} parent=1 // pred_region
      %20 = dma.done [#allocation3], 256
    $region9: #{tpu_custom_call.1} parent=1 // pred_fallthru
      _
    %v21 = vld [vmem:[#allocation2] sm:$0xff]
    %v22 = vld [vmem:[#allocation2 + $0x8] sm:$0xff]
    %v23 = vmul.f32 %v21, 2.0
    %v24 = vmul.f32 %v22, 2.0
    %v25 = vand.u32 2147483647, %v23
    %vm26 = vcmp.le.f32.partialorder %v25, 0.7853982
    %vm27 = vcmp.lt.s32.totalorder %v23, 0
    %v28 = vand.u32 %v23, 2139095040
    %v29 = vshrl.u32 %v28, 23
    %v30 = vsub.s32 %v29, 127
    %v31 = vand.u32 2147483647, %v23
    %v32 = vand.u32 %v31, 8388607
    %v33 = vor.u32 %v32, 8388608
    %v34 = vsub.s32 0, %v33
    %v35 = vadd.s32 %v30, 1
    %vm36 = vcmp.gt.s32.totalorder %v35, 0
    %v37 = vsel %vm36, %v35, 0
    %v38 = vshrl.u32 %v37, 5
    %v39 = vand.u32 %v37, 31
    %v40 = vsub.s32 32, %v39
    %v41 = vshrl.u32 683565275, %v40
    %v42 = vshll.u32 683565275, %v39
    %v43 = vshrl.u32 2475754826, %v40
    %v44 = vor.u32 %v42, %v43
    %v45 = vshll.u32 2475754826, %v39
    %v46 = vshrl.u32 2131351028, %v40
    %v47 = vor.u32 %v45, %v46
    %v48 = vshll.u32 2131351028, %v39
    %v49 = vshrl.u32 2102212464, %v40
    %v50 = vor.u32 %v48, %v49
    %v51 = vshll.u32 2102212464, %v39
    %v52 = vshrl.u32 920167782, %v40
    %v53 = vor.u32 %v51, %v52
    %v54 = vshll.u32 920167782, %v39
    %v55 = vshrl.u32 1326507024, %v40
    %v56 = vor.u32 %v54, %v55
    %vm57 = vcmp.lt.s32.totalorder %v38, 1
    %vm58 = vcmp.lt.s32.totalorder %v38, 2
    %vm59 = vcmp.lt.s32.totalorder %v38, 3
    %vm60 = vcmp.lt.s32.totalorder %v38, 4
    %v61 = vsel %vm57, %v41, %v44
    %v62 = vsel %vm60, %v50, 2102212464
    %v63 = vsel %vm59, %v47, %v62
    %v64 = vsel %vm58, %v61, %v63
    %v65 = vsel %vm57, %v44, %v47
    %v66 = vsel %vm60, %v53, 920167782
    %v67 = vsel %vm59, %v50, %v66
    %v68 = vsel %vm58, %v65, %v67
    %v69 = vsel %vm57, %v47, %v50
    %v70 = vsel %vm60, %v56, 1326507024
    %v71 = vsel %vm59, %v53, %v70
    %v72 = vsel %vm58, %v69, %v71
    %v73 = vshll.u32 %v33, 8
    %v74 = vmul.u32.u64.compose %v73, %v72
    %v75 = vextract.low.u32 %v74
    %v76 = vextract.high.u32 %v74
    %v77 = vmul.u32.u64.compose %v73, %v68
    %v78 = vextract.low.u32 %v77
    %v79 = vextract.high.u32 %v77
    %v80 = vmul.u32 %v73, %v64
    %v81 = vadd.s32 %v76, %v78
    %vm82 = vc.u32 %v76, %v78
    %v83 = vadd.s32 %v79, 1
    %v84 = vsel %vm82, %v83, %v79
    %v85 = vadd.s32 %v80, %v84
    %v86 = vadd.s32 %v85, 536870912
    %v87 = vshrl.u32 %v86, 30
    %v88 = vshll.u32 %v87, 30
    %v89 = vsub.s32 %v85, %v88
    %vm90 = vcmp.lt.s32.totalorder %v89, 0
    %v91 = vsub.s32 0, %v89
    %v92 = vsel %vm90, %v91, %v89
    %v93 = vclz %v92
    %v94 = vsub.s32 %v93, 2
    %vm95 = vcmp.gt.s32.totalorder 0, %v94
    %v96 = vsel %vm95, 0, %v94
    %v97 = vsub.s32 32, %v96
    %v98 = vshll.u32 %v89, %v96
    %v99 = vshrl.u32 %v81, %v97
    %v100 = vor.u32 %v98, %v99
    %v101 = vsub.s32 4294967266, %v96
    %v102 = vadd.s32 %v101, 127
    %v103 = vshll.u32 %v102, 23
    %v104 = vor.u32 4788187, %v103
    %v105 = vand.u32 2147483647, %v104
    %v107 = vcvt.s32.f32 %v100
    %v108 = vmul.f32 %v107, %v105
    %v109 = vxor.u32 %v108, 2147483648
    %v110 = vsel %vm27, %v109, %v108
    %v111 = vsub.s32 4, %v87
    %v112 = vsel %vm27, %v111, %v87
    %v113 = vsel %vm26, %v23, %v110
    %v114 = vsel %vm26, 0, %v112
    %v115 = vcosq.f32.pop %v113
    %v116 = vsinq.f32.pop %v113
    %vm117 = vweird.f32 %v23
    %v118 = vadd.s32 %v114, 3
    %v119 = vand.u32 %v118, 3
    %vm120 = vcmp.lt.s32.totalorder %v119, 2
    %vm121 = vcmp.eq.s32.totalorder %v119, 0
    %v122 = vxor.u32 %v116, 2147483648
    %v123 = vsel %vm121, %v115, %v122
    %vm124 = vcmp.eq.s32.totalorder %v119, 2
    %v125 = vxor.u32 %v115, 2147483648
    %v126 = vsel %vm124, %v125, %v116
    %v127 = vsel %vm120, %v123, %v126
    %v128 = vsel %vm117, nan, %v127
    %v129 = vand.u32 2147483647, %v24
    %vm130 = vcmp.le.f32.partialorder %v129, 0.7853982
    %vm131 = vcmp.lt.s32.totalorder %v24, 0
    %v132 = vand.u32 %v24, 2139095040
    %v133 = vshrl.u32 %v132, 23
    %v134 = vsub.s32 %v133, 127
    %v135 = vand.u32 2147483647, %v24
    %v136 = vand.u32 %v135, 8388607
    %v137 = vor.u32 %v136, 8388608
    %v138 = vsub.s32 0, %v137
    %v139 = vadd.s32 %v134, 1
    %vm140 = vcmp.gt.s32.totalorder %v139, 0
    %v141 = vsel %vm140, %v139, 0
    %v142 = vshrl.u32 %v141, 5
    %v143 = vand.u32 %v141, 31
    %v144 = vsub.s32 32, %v143
    %v145 = vshrl.u32 683565275, %v144
    %v146 = vshll.u32 683565275, %v143
    %v147 = vshrl.u32 2475754826, %v144
    %v148 = vor.u32 %v146, %v147
    %v149 = vshll.u32 2475754826, %v143
    %v150 = vshrl.u32 2131351028, %v144
    %v151 = vor.u32 %v149, %v150
    %v152 = vshll.u32 2131351028, %v143
    %v153 = vshrl.u32 2102212464, %v144
    %v154 = vor.u32 %v152, %v153
    %v155 = vshll.u32 2102212464, %v143
    %v156 = vshrl.u32 920167782, %v144
    %v157 = vor.u32 %v155, %v156
    %v158 = vshll.u32 920167782, %v143
    %v159 = vshrl.u32 1326507024, %v144
    %v160 = vor.u32 %v158, %v159
    %vm161 = vcmp.lt.s32.totalorder %v142, 1
    %vm162 = vcmp.lt.s32.totalorder %v142, 2
    %vm163 = vcmp.lt.s32.totalorder %v142, 3
    %vm164 = vcmp.lt.s32.totalorder %v142, 4
    %v165 = vsel %vm161, %v145, %v148
    %v166 = vsel %vm164, %v154, 2102212464
    %v167 = vsel %vm163, %v151, %v166
    %v168 = vsel %vm162, %v165, %v167
    %v169 = vsel %vm161, %v148, %v151
    %v170 = vsel %vm164, %v157, 920167782
    %v171 = vsel %vm163, %v154, %v170
    %v172 = vsel %vm162, %v169, %v171
    %v173 = vsel %vm161, %v151, %v154
    %v174 = vsel %vm164, %v160, 1326507024
    %v175 = vsel %vm163, %v157, %v174
    %v176 = vsel %vm162, %v173, %v175
    %v177 = vshll.u32 %v137, 8
    %v178 = vmul.u32.u64.compose %v177, %v176
    %v179 = vextract.low.u32 %v178
    %v180 = vextract.high.u32 %v178
    %v181 = vmul.u32.u64.compose %v177, %v172
    %v182 = vextract.low.u32 %v181
    %v183 = vextract.high.u32 %v181
    %v184 = vmul.u32 %v177, %v168
    %v185 = vadd.s32 %v180, %v182
    %vm186 = vc.u32 %v180, %v182
    %v187 = vadd.s32 %v183, 1
    %v188 = vsel %vm186, %v187, %v183
    %v189 = vadd.s32 %v184, %v188
    %v190 = vadd.s32 %v189, 536870912
    %v191 = vshrl.u32 %v190, 30
    %v192 = vshll.u32 %v191, 30
    %v193 = vsub.s32 %v189, %v192
    %vm194 = vcmp.lt.s32.totalorder %v193, 0
    %v195 = vsub.s32 0, %v193
    %v196 = vsel %vm194, %v195, %v193
    %v197 = vclz %v196
    %v198 = vsub.s32 %v197, 2
    %vm199 = vcmp.gt.s32.totalorder 0, %v198
    %v200 = vsel %vm199, 0, %v198
    %v201 = vsub.s32 32, %v200
    %v202 = vshll.u32 %v193, %v200
    %v203 = vshrl.u32 %v185, %v201
    %v204 = vor.u32 %v202, %v203
    %v205 = vsub.s32 4294967266, %v200
    %v206 = vadd.s32 %v205, 127
    %v207 = vshll.u32 %v206, 23
    %v208 = vor.u32 4788187, %v207
    %v209 = vand.u32 2147483647, %v208
    %v211 = vcvt.s32.f32 %v204
    %v212 = vmul.f32 %v211, %v209
    %v213 = vxor.u32 %v212, 2147483648
    %v214 = vsel %vm131, %v213, %v212
    %v215 = vsub.s32 4, %v191
    %v216 = vsel %vm131, %v215, %v191
    %v217 = vsel %vm130, %v24, %v214
    %v218 = vsel %vm130, 0, %v216
    %v219 = vcosq.f32.pop %v217
    %v220 = vsinq.f32.pop %v217
    %vm221 = vweird.f32 %v24
    %v222 = vadd.s32 %v218, 3
    %v223 = vand.u32 %v222, 3
    %vm224 = vcmp.lt.s32.totalorder %v223, 2
    %vm225 = vcmp.eq.s32.totalorder %v223, 0
    %v226 = vxor.u32 %v220, 2147483648
    %v227 = vsel %vm225, %v219, %v226
    %vm228 = vcmp.eq.s32.totalorder %v223, 2
    %v229 = vxor.u32 %v219, 2147483648
    %v230 = vsel %vm228, %v229, %v220
    %v231 = vsel %vm224, %v227, %v230
    %v232 = vsel %vm221, nan, %v231
    %v233 = vmul.f32 %v21, 3.0
    %v234 = vmul.f32 %v22, 3.0
    %v235 = vand.u32 2147483647, %v233
    %vm236 = vcmp.le.f32.partialorder %v235, 0.7853982
    %vm237 = vcmp.lt.s32.totalorder %v233, 0
    %v238 = vand.u32 %v233, 2139095040
    %v239 = vshrl.u32 %v238, 23
    %v240 = vsub.s32 %v239, 127
    %v241 = vand.u32 2147483647, %v233
    %v242 = vand.u32 %v241, 8388607
    %v243 = vor.u32 %v242, 8388608
    %v244 = vsub.s32 0, %v243
    %v245 = vadd.s32 %v240, 1
    %vm246 = vcmp.gt.s32.totalorder %v245, 0
    %v247 = vsel %vm246, %v245, 0
    %v248 = vshrl.u32 %v247, 5
    %v249 = vand.u32 %v247, 31
    %v250 = vsub.s32 32, %v249
    %v251 = vshrl.u32 683565275, %v250
    %v252 = vshll.u32 683565275, %v249
    %v253 = vshrl.u32 2475754826, %v250
    %v254 = vor.u32 %v252, %v253
    %v255 = vshll.u32 2475754826, %v249
    %v256 = vshrl.u32 2131351028, %v250
    %v257 = vor.u32 %v255, %v256
    %v258 = vshll.u32 2131351028, %v249
    %v259 = vshrl.u32 2102212464, %v250
    %v260 = vor.u32 %v258, %v259
    %v261 = vshll.u32 2102212464, %v249
    %v262 = vshrl.u32 920167782, %v250
    %v263 = vor.u32 %v261, %v262
    %v264 = vshll.u32 920167782, %v249
    %v265 = vshrl.u32 1326507024, %v250
    %v266 = vor.u32 %v264, %v265
    %vm267 = vcmp.lt.s32.totalorder %v248, 1
    %vm268 = vcmp.lt.s32.totalorder %v248, 2
    %vm269 = vcmp.lt.s32.totalorder %v248, 3
    %vm270 = vcmp.lt.s32.totalorder %v248, 4
    %v271 = vsel %vm267, %v251, %v254
    %v272 = vsel %vm270, %v260, 2102212464
    %v273 = vsel %vm269, %v257, %v272
    %v274 = vsel %vm268, %v271, %v273
    %v275 = vsel %vm267, %v254, %v257
    %v276 = vsel %vm270, %v263, 920167782
    %v277 = vsel %vm269, %v260, %v276
    %v278 = vsel %vm268, %v275, %v277
    %v279 = vsel %vm267, %v257, %v260
    %v280 = vsel %vm270, %v266, 1326507024
    %v281 = vsel %vm269, %v263, %v280
    %v282 = vsel %vm268, %v279, %v281
    %v283 = vshll.u32 %v243, 8
    %v284 = vmul.u32.u64.compose %v283, %v282
    %v285 = vextract.low.u32 %v284
    %v286 = vextract.high.u32 %v284
    %v287 = vmul.u32.u64.compose %v283, %v278
    %v288 = vextract.low.u32 %v287
    %v289 = vextract.high.u32 %v287
    %v290 = vmul.u32 %v283, %v274
    %v291 = vadd.s32 %v286, %v288
    %vm292 = vc.u32 %v286, %v288
    %v293 = vadd.s32 %v289, 1
    %v294 = vsel %vm292, %v293, %v289
    %v295 = vadd.s32 %v290, %v294
    %v296 = vadd.s32 %v295, 536870912
    %v297 = vshrl.u32 %v296, 30
    %v298 = vshll.u32 %v297, 30
    %v299 = vsub.s32 %v295, %v298
    %vm300 = vcmp.lt.s32.totalorder %v299, 0
    %v301 = vsub.s32 0, %v299
    %v302 = vsel %vm300, %v301, %v299
    %v303 = vclz %v302
    %v304 = vsub.s32 %v303, 2
    %vm305 = vcmp.gt.s32.totalorder 0, %v304
    %v306 = vsel %vm305, 0, %v304
    %v307 = vsub.s32 32, %v306
    %v308 = vshll.u32 %v299, %v306
    %v309 = vshrl.u32 %v291, %v307
    %v310 = vor.u32 %v308, %v309
    %v311 = vsub.s32 4294967266, %v306
    %v312 = vadd.s32 %v311, 127
    %v313 = vshll.u32 %v312, 23
    %v314 = vor.u32 4788187, %v313
    %v315 = vand.u32 2147483647, %v314
    %v317 = vcvt.s32.f32 %v310
    %v318 = vmul.f32 %v317, %v315
    %v319 = vxor.u32 %v318, 2147483648
    %v320 = vsel %vm237, %v319, %v318
    %v321 = vsub.s32 4, %v297
    %v322 = vsel %vm237, %v321, %v297
    %v323 = vsel %vm236, %v233, %v320
    %v324 = vsel %vm236, 0, %v322
    %v325 = vcosq.f32.pop %v323
    %v326 = vsinq.f32.pop %v323
    %vm327 = vweird.f32 %v233
    %v328 = vand.u32 %v324, 3
    %vm329 = vcmp.lt.s32.totalorder %v328, 2
    %vm330 = vcmp.eq.s32.totalorder %v328, 0
    %v331 = vxor.u32 %v326, 2147483648
    %v332 = vsel %vm330, %v325, %v331
    %vm333 = vcmp.eq.s32.totalorder %v328, 2
    %v334 = vxor.u32 %v325, 2147483648
    %v335 = vsel %vm333, %v334, %v326
    %v336 = vsel %vm329, %v332, %v335
    %v337 = vsel %vm327, nan, %v336
    %v338 = vand.u32 2147483647, %v234
    %vm339 = vcmp.le.f32.partialorder %v338, 0.7853982
    %vm340 = vcmp.lt.s32.totalorder %v234, 0
    %v341 = vand.u32 %v234, 2139095040
    %v342 = vshrl.u32 %v341, 23
    %v343 = vsub.s32 %v342, 127
    %v344 = vand.u32 2147483647, %v234
    %v345 = vand.u32 %v344, 8388607
    %v346 = vor.u32 %v345, 8388608
    %v347 = vsub.s32 0, %v346
    %v348 = vadd.s32 %v343, 1
    %vm349 = vcmp.gt.s32.totalorder %v348, 0
    %v350 = vsel %vm349, %v348, 0
    %v351 = vshrl.u32 %v350, 5
    %v352 = vand.u32 %v350, 31
    %v353 = vsub.s32 32, %v352
    %v354 = vshrl.u32 683565275, %v353
    %v355 = vshll.u32 683565275, %v352
    %v356 = vshrl.u32 2475754826, %v353
    %v357 = vor.u32 %v355, %v356
    %v358 = vshll.u32 2475754826, %v352
    %v359 = vshrl.u32 2131351028, %v353
    %v360 = vor.u32 %v358, %v359
    %v361 = vshll.u32 2131351028, %v352
    %v362 = vshrl.u32 2102212464, %v353
    %v363 = vor.u32 %v361, %v362
    %v364 = vshll.u32 2102212464, %v352
    %v365 = vshrl.u32 920167782, %v353
    %v366 = vor.u32 %v364, %v365
    %v367 = vshll.u32 920167782, %v352
    %v368 = vshrl.u32 1326507024, %v353
    %v369 = vor.u32 %v367, %v368
    %vm370 = vcmp.lt.s32.totalorder %v351, 1
    %vm371 = vcmp.lt.s32.totalorder %v351, 2
    %vm372 = vcmp.lt.s32.totalorder %v351, 3
    %vm373 = vcmp.lt.s32.totalorder %v351, 4
    %v374 = vsel %vm370, %v354, %v357
    %v375 = vsel %vm373, %v363, 2102212464
    %v376 = vsel %vm372, %v360, %v375
    %v377 = vsel %vm371, %v374, %v376
    %v378 = vsel %vm370, %v357, %v360
    %v379 = vsel %vm373, %v366, 920167782
    %v380 = vsel %vm372, %v363, %v379
    %v381 = vsel %vm371, %v378, %v380
    %v382 = vsel %vm370, %v360, %v363
    %v383 = vsel %vm373, %v369, 1326507024
    %v384 = vsel %vm372, %v366, %v383
    %v385 = vsel %vm371, %v382, %v384
    %v386 = vshll.u32 %v346, 8
    %v387 = vmul.u32.u64.compose %v386, %v385
    %v388 = vextract.low.u32 %v387
    %v389 = vextract.high.u32 %v387
    %v390 = vmul.u32.u64.compose %v386, %v381
    %v391 = vextract.low.u32 %v390
    %v392 = vextract.high.u32 %v390
    %v393 = vmul.u32 %v386, %v377
    %v394 = vadd.s32 %v389, %v391
    %vm395 = vc.u32 %v389, %v391
    %v396 = vadd.s32 %v392, 1
    %v397 = vsel %vm395, %v396, %v392
    %v398 = vadd.s32 %v393, %v397
    %v399 = vadd.s32 %v398, 536870912
    %v400 = vshrl.u32 %v399, 30
    %v401 = vshll.u32 %v400, 30
    %v402 = vsub.s32 %v398, %v401
    %vm403 = vcmp.lt.s32.totalorder %v402, 0
    %v404 = vsub.s32 0, %v402
    %v405 = vsel %vm403, %v404, %v402
    %v406 = vclz %v405
    %v407 = vsub.s32 %v406, 2
    %vm408 = vcmp.gt.s32.totalorder 0, %v407
    %v409 = vsel %vm408, 0, %v407
    %v410 = vsub.s32 32, %v409
    %v411 = vshll.u32 %v402, %v409
    %v412 = vshrl.u32 %v394, %v410
    %v413 = vor.u32 %v411, %v412
    %v414 = vsub.s32 4294967266, %v409
    %v415 = vadd.s32 %v414, 127
    %v416 = vshll.u32 %v415, 23
    %v417 = vor.u32 4788187, %v416
    %v418 = vand.u32 2147483647, %v417
    %v420 = vcvt.s32.f32 %v413
    %v421 = vmul.f32 %v420, %v418
    %v422 = vxor.u32 %v421, 2147483648
    %v423 = vsel %vm340, %v422, %v421
    %v424 = vsub.s32 4, %v400
    %v425 = vsel %vm340, %v424, %v400
    %v426 = vsel %vm339, %v234, %v423
    %v427 = vsel %vm339, 0, %v425
    %v428 = vcosq.f32.pop %v426
    %v429 = vsinq.f32.pop %v426
    %vm430 = vweird.f32 %v234
    %v431 = vand.u32 %v427, 3
    %vm432 = vcmp.lt.s32.totalorder %v431, 2
    %vm433 = vcmp.eq.s32.totalorder %v431, 0
    %v434 = vxor.u32 %v429, 2147483648
    %v435 = vsel %vm433, %v428, %v434
    %vm436 = vcmp.eq.s32.totalorder %v431, 2
    %v437 = vxor.u32 %v428, 2147483648
    %v438 = vsel %vm436, %v437, %v429
    %v439 = vsel %vm432, %v435, %v438
    %v440 = vsel %vm430, nan, %v439
    %v441 = vmul.f32 %v128, %v337
    %v442 = vmul.f32 %v232, %v440
    %v443 = vmul.f32 %v441, 0.6666667
    %v444 = vmul.f32 %v442, 0.6666667
    %v445 = vadd.f32 %v443, %v21
    %v446 = vadd.f32 %v444, %v22
    %447 = vst [vmem:[#allocation5] sm:$0xff] %v445
    %448 = vst [vmem:[#allocation5 + $0x8] sm:$0xff] %v446
    // Predicated region
    $region10: #{tpu_custom_call.1} parent=1 // pred_check
      _
    $region11: #{tpu_custom_call.1} parent=1 // pred_check_branch
      %450 = sbr.rel (0) target = $region13
    $region12: #{tpu_custom_call.1} parent=1 // pred_region
      %s452 = ssub.s32 256, 256
      %453 = vsyncadd [#allocation4], %s452
      %s455 = sshll.u32 [#allocation5], 4
      %s456 = int_to_ptr.vmem [resolvable:$true] %s455
      %458 = dma.vmem_to_hbm [thread:$0]  %s456, 256, %s1, [#allocation4]
    $region13: #{tpu_custom_call.1} parent=1 // pred_fallthru
      _
    // Predicated region
    $region14: #{tpu_custom_call.1} parent=1 // pred_check
      _
    $region15: #{tpu_custom_call.1} parent=1 // pred_check_branch
      %460 = sbr.rel (0) target = $region17
    $region16: #{tpu_custom_call.1} parent=1 // pred_region
      %461 = dma.done [#allocation4], 256
    $region17: #{tpu_custom_call.1} parent=1 // pred_fallthru
      _
    %462 = vsyncpa [#allocation3], 1
    %463 = vsyncpa [#allocation4], 1

</llo_original>
